<compile_context>
chip_gen: v6e
topology: v6e:2x2x1
jax: 0.10.0
libtpu: 0.0.40
codegen_flags: <defaults>
</compile_context>

<pallas_src>
import functools

import jax
import jax.numpy as jnp
from jax.experimental import pallas as pl
from jax.experimental.pallas import tpu as pltpu


def _linear_clamp_kernel(x_ref, w_ref, b_ref, o_ref, *, min_v, max_v, use_bf16):
    # x_ref: (tm, K), w_ref: (tn, K) (PyTorch (OUT, IN) layout, untransposed),
    # b_ref: (1, tn), o_ref: (tm, tn).  Full K per block -> no accumulator.
    a = x_ref[...]
    w = w_ref[...]
    if use_bf16:
        a = a.astype(jnp.bfloat16)
        w = w.astype(jnp.bfloat16)
    y = jax.lax.dot_general(
        a,
        w,
        dimension_numbers=(((1,), (1,)), ((), ())),  # contract K of both operands
        preferred_element_type=jnp.float32,
    )
    y = y + b_ref[...]
    y = jnp.maximum(y, min_v)   # torch.clamp_min(v1, min_v)
    y = jnp.minimum(y, max_v)   # torch.clamp(v2, None, max_v)
    o_ref[...] = y.astype(o_ref.dtype)


def _round_up(x, m):
    return (x + m - 1) // m * m


def _pick_tile(dim, cap, align):
    """Largest tile <= cap that is a multiple of `align` and divides the
    align-rounded dim (falls back to cap). Keeps masked/padded work minimal."""
    r = _round_up(dim, align)
    if r <= cap:
        return r
    for t in range(cap, align - 1, -align):
        if r % t == 0:
            return t
    return cap


@functools.partial(jax.jit, static_argnames=("min_v", "max_v", "use_bf16"))
def linear_clamp(x, weight, bias, min_v, max_v, *, use_bf16=False):
    """y = clamp(x @ weight.T + bias, min_v, max_v).

    x: (B, IN) f32, weight: (OUT, IN) f32 (PyTorch layout), bias: (OUT,) f32.
    """
    B, IN = x.shape
    OUT, IN2 = weight.shape
    assert IN == IN2 and bias.shape == (OUT,)

    b2 = bias.reshape(1, OUT)  # free reshape; lane-dense bias row
    kernel = functools.partial(
        _linear_clamp_kernel,
        min_v=float(min_v), max_v=float(max_v), use_bf16=bool(use_bf16),
    )

    # ---- Fast path: whole problem fits comfortably in VMEM --------------------
    # Single gridless pallas_call, full-array blocks, no scratch, no pad, no
    # transpose.  This is the path the module-sized case (1x32 @ 32x32) takes.
    total_bytes = 4 * (B * IN + OUT * IN + B * OUT + OUT)
    if total_bytes <= 2 * 1024 * 1024:
        return pl.pallas_call(
            kernel,
            out_shape=jax.ShapeDtypeStruct((B, OUT), x.dtype),
        )(x, weight, b2)

    # ---- Tiled path: grid over (M, N) only; K stays whole per block -----------
    tm = _pick_tile(B, 256, 8)
    tn = _pick_tile(OUT, 256, 128)
    grid = (pl.cdiv(B, tm), pl.cdiv(OUT, tn))

    return pl.pallas_call(
        kernel,
        out_shape=jax.ShapeDtypeStruct((B, OUT), x.dtype),
        grid=grid,
        in_specs=[
            pl.BlockSpec((tm, IN), lambda i, j: (i, 0)),   # x tile, full K
            pl.BlockSpec((tn, IN), lambda i, j: (j, 0)),   # weight tile (OUT, IN), full K
            pl.BlockSpec((1, tn), lambda i, j: (0, j)),    # bias tile
        ],
        out_specs=pl.BlockSpec((tm, tn), lambda i, j: (i, j)),
        compiler_params=pltpu.CompilerParams(
            # TODO(synk): use CORE_PARALLEL / core_map on the M axis when
            # explicitly targeting both v7x TensorCores for very large B.
            dimension_semantics=("parallel", "parallel"),
        ),
    )(x, weight, b2)


def _reference(x, weight, bias, min_v, max_v):
    return jnp.minimum(jnp.maximum(x @ weight.T + bias, min_v), max_v)


if __name__ == "__main__":
    key = jax.random.PRNGKey(0)
    min_v = 0.2
    max_v = 0.8

    k_x, k_w, k_b, k_x2, k_w2, k_b2 = jax.random.split(key, 6)

    # --- Module-sized case: Linear(32, 32), x1 = randn(1, 32) -> fast path -----
    B, IN, OUT = 1, 32, 32
    x1 = jax.random.normal(k_x, (B, IN), dtype=jnp.float32)
    bound = 1.0 / (IN ** 0.5)  # PyTorch Linear default init bound
    weight = jax.random.uniform(k_w, (OUT, IN), jnp.float32, -bound, bound)
    bias = jax.random.uniform(k_b, (OUT,), jnp.float32, -bound, bound)

    out = linear_clamp(x1, weight, bias, min_v, max_v)
    jax.block_until_ready(out)
    ref = _reference(x1, weight, bias, min_v, max_v)
    assert out.shape == (B, OUT)
    assert jnp.allclose(out, ref, atol=1e-5, rtol=1e-5)

    # --- Larger case: tiled (M, N) grid, whole-K blocks, masked edge tiles -----
    B2, IN2, OUT2 = 300, 768, 640
    x2 = jax.random.normal(k_x2, (B2, IN2), dtype=jnp.float32)
    bound2 = 1.0 / (IN2 ** 0.5)
    weight2 = jax.random.uniform(k_w2, (OUT2, IN2), jnp.float32, -bound2, bound2)
    bias2 = jax.random.uniform(k_b2, (OUT2,), jnp.float32, -bound2, bound2)

    out2 = linear_clamp(x2, weight2, bias2, min_v, max_v)
    jax.block_until_ready(out2)
    ref2 = _reference(x2, weight2, bias2, min_v, max_v)
    assert out2.shape == (B2, OUT2)
    assert jnp.allclose(out2, ref2, atol=1e-4, rtol=1e-4)

    print("KERNEL_OK")
</pallas_src>

<mosaic_0001>
module attributes {stable_mosaic.version = 11 : i64} {
  func.func @_linear_clamp_kernel(%arg0: memref<1x32xf32, #tpu.memory_space<vmem>>, %arg1: memref<32x32xf32, #tpu.memory_space<vmem>>, %arg2: memref<1x32xf32, #tpu.memory_space<vmem>>, %arg3: memref<1x32xf32, #tpu.memory_space<vmem>>) attributes {dimension_semantics = [], scalar_prefetch = 0 : i64, scratch_operands = 0 : i64, tpu.core_type = #tpu.core_type<tc>} {
    %c0 = arith.constant 0 : index
    %c0_0 = arith.constant 0 : index
    %0 = vector.load %arg0[%c0, %c0_0] : memref<1x32xf32, #tpu.memory_space<vmem>>, vector<1x32xf32>
    %c0_1 = arith.constant 0 : index
    %c0_2 = arith.constant 0 : index
    %1 = vector.load %arg1[%c0_1, %c0_2] : memref<32x32xf32, #tpu.memory_space<vmem>>, vector<32x32xf32>
    %cst = arith.constant dense<0.000000e+00> : vector<1x32xf32>
    %2 = tpu.matmul %0, %1, %cst {dimension_numbers = #tpu.dot_dimension_numbers<[1], [1], [0], [0], [0, 0, 1, 0], [], []>} : vector<1x32xf32>, vector<32x32xf32>, vector<1x32xf32> -> vector<1x32xf32>
    %c0_3 = arith.constant 0 : index
    %c0_4 = arith.constant 0 : index
    %3 = vector.load %arg2[%c0_3, %c0_4] : memref<1x32xf32, #tpu.memory_space<vmem>>, vector<1x32xf32>
    %4 = arith.addf %2, %3 : vector<1x32xf32>
    %cst_5 = arith.constant 2.000000e-01 : f32
    %5 = vector.broadcast %cst_5 : f32 to vector<1x32xf32>
    %6 = arith.maximumf %4, %5 : vector<1x32xf32>
    %cst_6 = arith.constant 8.000000e-01 : f32
    %7 = vector.broadcast %cst_6 : f32 to vector<1x32xf32>
    %8 = arith.minimumf %6, %7 : vector<1x32xf32>
    %c0_7 = arith.constant 0 : index
    %c0_8 = arith.constant 0 : index
    %9 = vector.load %arg3[%c0_7, %c0_8] : memref<1x32xf32, #tpu.memory_space<vmem>>, vector<1x32xf32>
    tpu.vector_store %arg3[%c0_7, %c0_8], %8 {strides = array<i32>} : memref<1x32xf32, #tpu.memory_space<vmem>>, vector<1x32xf32>,
    return
  }
}

</mosaic_0001>

<llo_original>
// kernel: linear_clamp.1
$region0: #{linear_clamp.1}
  #allocation0 [shape = 'u32[]', space=smem, size = 0x4, offset = 0x4, fixed_abs, tag = 'smem constant byte address 0x4 - core index']
  #allocation1 [shape = 'u32[144,128]{1,0:T(1,128)}', space=vmem, size = 0x12000, scoped, tag = 'internal scratch']
  %s0 = inlined_call_operand.vmem [shape: f32[1,32], index: 0, kind: input, shape index: {}]
  %s1 = inlined_call_operand.hbm [shape: f32[32,32], index: 1, kind: input, shape index: {}]
  %s2 = inlined_call_operand.vmem [shape: f32[1,32], index: 2, kind: input, shape index: {}]
  %s3 = inlined_call_operand.hbm [shape: f32[1,32], index: 3, kind: output, shape index: {}]
  %s4 = sld [smem:[#allocation0]]
  $region26: #{linear_clamp.1} parent=0
    _
  %s6 = ssub.s32 1, %s4
  %s7 = scalar_select 0, %s6, %s4
  $region1: #{linear_clamp.1} parent=0
    #allocation2 [shape = 'u8[16384]{0}', space=vmem, size = 0x4000, scoped, tag = 'input window, operand 1, single buffered']
    #allocation3 [shape = 's32[1]{0}', space=sflag, size = 0x4, scoped, tag = 'scoped memory for linear_clamp.1']
    #allocation4 [shape = 's32[1]{0}', space=sflag, size = 0x4, scoped, tag = 'scoped memory for linear_clamp.1']
    #allocation5 [shape = 'u8[512]{0}', space=vmem, size = 0x400, scoped, tag = 'output window, operand 0, single buffered']
    %8 = vsyncpa [#allocation3], 0
    %9 = vsyncpa [#allocation4], 0
    // Predicated region
    $region2: #{linear_clamp.1} parent=1 // pred_check
      _
    $region3: #{linear_clamp.1} parent=1 // pred_check_branch
      %11 = sbr.rel (0) target = $region5
    $region4: #{linear_clamp.1} parent=1 // pred_region
      _
    $region5: #{linear_clamp.1} parent=1 // pred_fallthru
      _
    // Predicated region
    $region6: #{linear_clamp.1} parent=1 // pred_check
      _
    $region7: #{linear_clamp.1} parent=1 // pred_check_branch
      %13 = sbr.rel (0) target = $region9
    $region8: #{linear_clamp.1} parent=1 // pred_region
      %s15 = ssub.s32 512, 512
      %16 = vsyncadd [#allocation3], %s15
      %s17 = sshll.u32 [#allocation2], 4
      %s18 = int_to_ptr.vmem [resolvable:$true] %s17
      %23 = dma.hbm_to_vmem [thread:$0]  %s1, 512, %s18, [#allocation3], 128, 128, 8
    $region9: #{linear_clamp.1} parent=1 // pred_fallthru
      _
    // Predicated region
    $region10: #{linear_clamp.1} parent=1 // pred_check
      _
    $region11: #{linear_clamp.1} parent=1 // pred_check_branch
      %25 = sbr.rel (0) target = $region13
    $region12: #{linear_clamp.1} parent=1 // pred_region
      _
    $region13: #{linear_clamp.1} parent=1 // pred_fallthru
      _
    // Predicated region
    $region14: #{linear_clamp.1} parent=1 // pred_check
      _
    $region15: #{linear_clamp.1} parent=1 // pred_check_branch
      %27 = sbr.rel (0) target = $region17
    $region16: #{linear_clamp.1} parent=1 // pred_region
      %28 = dma.done [#allocation3], 512
    $region17: #{linear_clamp.1} parent=1 // pred_fallthru
      _
    %v29 = vld [vmem:[%s0] sm:$0x1]
    %v30 = vld [vmem:[#allocation2] sm:$0xff]
    %v31 = vld [vmem:[#allocation2 + $0x8] sm:$0xff]
    %v32 = vld [vmem:[#allocation2 + $0x10] sm:$0xff]
    %v33 = vld [vmem:[#allocation2 + $0x18] sm:$0xff]
    %v34 = vld [vmem:[%s2] sm:$0x1]
    %vm35 = vcmask 261120
    %v37 = vsel %vm35, %v29, 0
    %v40 = vsel %vm35, %v30, 0
    %v43 = vsel %vm35, %v31, 0
    %v46 = vsel %vm35, %v32, 0
    %v49 = vsel %vm35, %v33, 0
    %51 = vmatprep.subr.mxu0 0.0
    %52 = vmatpush1.xpose.msra.mxu0 0.0
    %53 = vmatprep.subr.mxu0 0.0
    %54 = vmatpush1.xpose.msra.mxu0 0.0
    %55 = vmatprep.subr.mxu0 0.0
    %56 = vmatpush1.xpose.msra.mxu0 0.0
    %57 = vmatprep.subr.mxu0 0.0
    %58 = vmatpush1.xpose.msra.mxu0 0.0
    %59 = vmatprep.subr.mxu0 0.0
    %60 = vmatpush1.xpose.msra.mxu0 0.0
    %61 = vmatprep.subr.mxu0 0.0
    %62 = vmatpush1.xpose.msra.mxu0 0.0
    %63 = vmatprep.subr.mxu0 0.0
    %64 = vmatpush1.xpose.msra.mxu0 0.0
    %65 = vmatprep.subr.mxu0 0.0
    %66 = vmatpush1.xpose.msra.mxu0 0.0
    %67 = vmatprep.subr.mxu0 0.0
    %68 = vmatpush1.xpose.msra.mxu0 0.0
    %69 = vmatprep.subr.mxu0 0.0
    %70 = vmatpush1.xpose.msra.mxu0 0.0
    %71 = vmatprep.subr.mxu0 0.0
    %72 = vmatpush1.xpose.msra.mxu0 0.0
    %73 = vmatprep.subr.mxu0 0.0
    %74 = vmatpush1.xpose.msra.mxu0 0.0
    %75 = vmatprep.subr.mxu0 0.0
    %76 = vmatpush1.xpose.msra.mxu0 %v49
    %77 = vmatprep.subr.mxu0 0.0
    %78 = vmatpush1.xpose.msra.mxu0 %v46
    %79 = vmatprep.subr.mxu0 0.0
    %80 = vmatpush1.xpose.msra.mxu0 %v43
    %81 = vmatprep.subr.mxu0 0.0
    %82 = vmatpush1.xpose.msra.mxu0 %v40
    %83 = vmatprep.subr.mxu0 0.0
    %84 = vmatpush2.xpose.msra.mxu0 0.0
    %85 = vmatprep.subr.mxu0 0.0
    %86 = vmatpush2.xpose.msra.mxu0 0.0
    %87 = vmatprep.subr.mxu0 0.0
    %88 = vmatpush2.xpose.msra.mxu0 0.0
    %89 = vmatprep.subr.mxu0 0.0
    %90 = vmatpush2.xpose.msra.mxu0 0.0
    %91 = vmatprep.subr.mxu0 0.0
    %92 = vmatpush2.xpose.msra.mxu0 0.0
    %93 = vmatprep.subr.mxu0 0.0
    %94 = vmatpush2.xpose.msra.mxu0 0.0
    %95 = vmatprep.subr.mxu0 0.0
    %96 = vmatpush2.xpose.msra.mxu0 0.0
    %97 = vmatprep.subr.mxu0 0.0
    %98 = vmatpush2.xpose.msra.mxu0 0.0
    %99 = vmatprep.subr.mxu0 0.0
    %100 = vmatpush2.xpose.msra.mxu0 0.0
    %101 = vmatprep.subr.mxu0 0.0
    %102 = vmatpush2.xpose.msra.mxu0 0.0
    %103 = vmatprep.subr.mxu0 0.0
    %104 = vmatpush2.xpose.msra.mxu0 0.0
    %105 = vmatprep.subr.mxu0 0.0
    %106 = vmatpush2.xpose.msra.mxu0 0.0
    %107 = vmatprep.subr.mxu0 0.0
    %108 = vmatpush2.xpose.msra.mxu0 0.0
    %109 = vmatprep.subr.mxu0 0.0
    %110 = vmatpush2.xpose.msra.mxu0 0.0
    %111 = vmatprep.subr.mxu0 0.0
    %112 = vmatpush2.xpose.msra.mxu0 0.0
    %113 = vmatprep.subr.mxu0 0.0
    %114 = vmatpush2.xpose.msra.mxu0 0.0
    %115 = vmatprep.mubr.f32.mxu0 0.0
    %116 = vmatmul.mubr.f32.gmra.mxu0 %v37
    %v117 = vpop.f32.mrf.mxu0
    %v118 = vadd.f32 %v34, %v117
    %v119 = vpop.f32.mrf.mxu0
    %120 = vdwg.mxu0
    %v121 = vmax.f32 %v118, 0.2
    %v122 = vmin.f32 %v121, 0.8
    %vm123 = vcmask 253952
    %124 = vst.msk [vmem:[#allocation5] sm:$0x1] %vm123, %v122
    // Predicated region
    $region18: #{linear_clamp.1} parent=1 // pred_check
      _
    $region19: #{linear_clamp.1} parent=1 // pred_check_branch
      %126 = sbr.rel (0) target = $region21
    $region20: #{linear_clamp.1} parent=1 // pred_region
      %s128 = ssub.s32 16, 16
      %129 = vsyncadd [#allocation4], %s128
      %s131 = sshll.u32 [#allocation5], 4
      %s132 = int_to_ptr.vmem [resolvable:$true] %s131
      %134 = dma.vmem_to_hbm [thread:$0]  %s132, 16, %s3, [#allocation4]
    $region21: #{linear_clamp.1} parent=1 // pred_fallthru
      _
    // Predicated region
    $region22: #{linear_clamp.1} parent=1 // pred_check
      _
    $region23: #{linear_clamp.1} parent=1 // pred_check_branch
      %136 = sbr.rel (0) target = $region25
    $region24: #{linear_clamp.1} parent=1 // pred_region
      %137 = dma.done [#allocation4], 16
    $region25: #{linear_clamp.1} parent=1 // pred_fallthru
      _
    %138 = vsyncpa [#allocation3], 1
    %139 = vsyncpa [#allocation4], 1

</llo_original>
